<compile_context>
chip_gen: v6e
topology: v6e:2x2x1
jax: 0.10.0
libtpu: 0.0.40
codegen_flags: <defaults>
</compile_context>

<pallas_src>
import itertools

import jax
import jax.numpy as jnp
import numpy as np
from jax.experimental import pallas as pl
from jax.experimental.pallas import tpu as pltpu


def chain(x):
    return list(itertools.chain.from_iterable(x))


def _round_up(x, m):
    return (x + m - 1) // m * m


def wemb_gather_kernel(idx_ref, mask_ref, wvec_hbm, out_ref, row_buf, sems):
    # idx_ref  : (N_pad,)     int32, SMEM (scalar prefetch), clamped to [0, V)
    # mask_ref : (TB, 1)      f32,   VMEM  -- 1.0 in-vocab, 0.0 OOV/pad
    # wvec_hbm : (V, D_pad)   f32,   HBM (pl.ANY) -- embedding table, not VMEM-resident
    # out_ref  : (TB, D_pad)  f32,   VMEM output block (lane-dense, D_pad % 128 == 0)
    # row_buf  : (TB, D_pad)  f32,   VMEM scratch -- gather landing buffer
    # sems     : (TB,)        DMA semaphores
    tb = out_ref.shape[0]
    base = pl.program_id(0) * tb

    # Issue one row-gather DMA per token in this block (all in flight at once).
    @pl.loop(0, tb)
    def _issue(t):
        row = idx_ref[base + t]
        pltpu.make_async_copy(wvec_hbm.at[row], row_buf.at[t], sems.at[t]).start()

    # Wait for all row DMAs of this block.
    @pl.loop(0, tb)
    def _wait(t):
        pltpu.make_async_copy(wvec_hbm.at[0], row_buf.at[t], sems.at[t]).wait()

    # Zero OOV / padding rows (matches torch's zeros-then-scatter semantics).
    out_ref[...] = row_buf[...] * mask_ref[...]


def wemb_forward(idx, wvec, *, max_token_block=256):
    """idx: (B, T) int32 with -1 for OOV/pad; wvec: (V, D) float32 -> (B, T, D)."""
    B, T = idx.shape
    V, D = wvec.shape
    N = B * T

    D_pad = _round_up(D, 128)                     # lane-dense output (300 -> 384)
    TB = max_token_block if N >= max_token_block else _round_up(N, 8)
    N_pad = _round_up(N, TB)

    idx_flat = idx.reshape(N).astype(jnp.int32)
    idx_flat = jnp.pad(idx_flat, (0, N_pad - N), constant_values=-1)
    valid = idx_flat >= 0
    # Clamp before the kernel: -1 must never reach an HBM DMA (no bounds check).
    idx_clamped = jnp.where(valid, idx_flat, 0).astype(jnp.int32)
    mask = valid.astype(wvec.dtype).reshape(N_pad, 1)
    wvec_pad = jnp.pad(wvec, ((0, 0), (0, D_pad - D)))

    grid = (N_pad // TB,)

    out_pad = pl.pallas_call(
        wemb_gather_kernel,
        out_shape=jax.ShapeDtypeStruct((N_pad, D_pad), wvec.dtype),
        grid_spec=pltpu.PrefetchScalarGridSpec(
            num_scalar_prefetch=1,                 # token indices -> SMEM
            grid=grid,
            in_specs=[
                pl.BlockSpec((TB, 1), lambda i, idx: (i, 0)),   # validity mask
                pl.BlockSpec(memory_space=pl.ANY),              # table stays in HBM
            ],
            out_specs=pl.BlockSpec((TB, D_pad), lambda i, idx: (i, 0)),
            scratch_shapes=[
                pltpu.VMEM((TB, D_pad), wvec.dtype),            # gather landing buffer
                pltpu.SemaphoreType.DMA((TB,)),
            ],
        ),
        compiler_params=pltpu.CompilerParams(
            dimension_semantics=("parallel",),     # many token blocks -> both v7x TCs
            vmem_limit_bytes=32 * 1024 * 1024,
        ),
        cost_estimate=pl.CostEstimate(
            flops=0,
            transcendentals=0,
            bytes_accessed=2 * N_pad * D_pad * 4 + 2 * N_pad * 4,
        ),
    )(idx_clamped, mask, wvec_pad)

    return out_pad[:N, :D].reshape(B, T, D)


class WembJax:
    """Host-side analogue of Wemb.__init__ / string handling.

    # TODO(synk): Simstring fuzzy vocab resolution has no Pallas equivalent;
    # here the task vocab is taken as-is (deterministic synthetic setup).
    """

    def __init__(self, tsk_words, key, dim=300):
        self.wtoi = {w: i for i, w in enumerate(tsk_words)}
        self.wvec = jax.random.normal(key, (len(tsk_words), dim), dtype=jnp.float32)

    def tokenize(self, batch):
        # Mirrors pad_sequence(..., batch_first=True, padding_value=-1) on the
        # mask, combined with the wtoi lookup: -1 encodes both OOV and padding.
        T = max(len(s) for s in batch)
        idx = np.full((len(batch), T), -1, dtype=np.int32)
        for b, s in enumerate(batch):
            for t, w in enumerate(s):
                idx[b, t] = self.wtoi.get(w, -1)
        return jnp.asarray(idx)

    def forward(self, batch):
        idx = self.tokenize(batch)
        return wemb_forward(idx, self.wvec)


if __name__ == "__main__":
    key = jax.random.PRNGKey(0)

    # Small deterministic vocab (V=16) with D=300 embeddings, as in the module.
    vocab = [f"word{i}" for i in range(16)]
    wemb = WembJax(vocab, key, dim=300)

    # batch of 2 sentences, ragged lengths (max T = 8), some OOV tokens.
    batch = [
        ["word0", "word3", "oov_a", "word7", "word1", "oov_b", "word15", "word2"],
        ["word5", "oov_c", "word9", "word12"],
    ]

    e = wemb.forward(batch)
    e = jax.block_until_ready(e)

    # Pure-numpy reference of the forward semantics for a correctness check.
    idx_np = np.asarray(wemb.tokenize(batch))
    wvec_np = np.asarray(wemb.wvec)
    B, T = idx_np.shape
    ref = np.zeros((B, T, wvec_np.shape[1]), dtype=np.float32)
    for b in range(B):
        for t in range(T):
            if idx_np[b, t] >= 0:
                ref[b, t] = wvec_np[idx_np[b, t]]

    np.testing.assert_allclose(np.asarray(e), ref, rtol=1e-6, atol=1e-6)
    assert e.shape == (2, 8, 300) and e.dtype == jnp.float32
    print("KERNEL_OK")
</pallas_src>

<mosaic_0001>
module attributes {stable_mosaic.version = 11 : i64} {
  func.func @wemb_gather_kernel(%arg0: i32, %arg1: memref<16xi32, #tpu.memory_space<smem>>, %arg2: memref<16x1xf32, #tpu.memory_space<vmem>>, %arg3: memref<16x384xf32, #tpu.memory_space<any>>, %arg4: memref<16x384xf32, #tpu.memory_space<vmem>>, %arg5: memref<16x384xf32, #tpu.memory_space<vmem>>, %arg6: memref<16x!tpu.dma_semaphore, #tpu.memory_space<semaphore_mem>>) attributes {dimension_semantics = [#tpu.dimension_semantics<parallel>], iteration_bounds = array<i64: 1>, scalar_prefetch = 1 : i64, scratch_operands = 2 : i64, tpu.core_type = #tpu.core_type<tc>, window_params = [{transform_indices = @transform_0, window_bounds = array<i64: 16, 1>}, {}, {transform_indices = @transform_2, window_bounds = array<i64: 16, 384>}]} {
    %c16_i32 = arith.constant 16 : i32
    %0 = arith.muli %arg0, %c16_i32 : i32
    %c0_i32 = arith.constant 0 : i32
    %c16_i32_0 = arith.constant 16 : i32
    %1 = arith.addi %c0_i32, %c16_i32_0 : i32
    %c1_i32 = arith.constant 1 : i32
    scf.for %arg7 = %c0_i32 to %1 step %c1_i32  : i32 {
      %c1_i32_11 = arith.constant 1 : i32
      %8 = arith.muli %arg7, %c1_i32_11 : i32
      %c0_i32_12 = arith.constant 0 : i32
      %9 = arith.addi %c0_i32_12, %8 : i32
      %10 = arith.addi %0, %9 : i32
      %11 = arith.index_cast %10 : i32 to index
      %12 = memref.load %arg1[%11] : memref<16xi32, #tpu.memory_space<smem>>
      %c0_i32_13 = arith.constant 0 : i32
      %13 = tpu.memref_slice %arg3[%12, %c0_i32_13] : memref<16x384xf32, #tpu.memory_space<any>> -> memref<1x384xf32, #tpu.memory_space<any>>
      %14 = tpu.memref_squeeze %13 : memref<1x384xf32, #tpu.memory_space<any>> -> memref<384xf32, #tpu.memory_space<any>>
      %c0_i32_14 = arith.constant 0 : i32
      %15 = tpu.memref_slice %arg5[%9, %c0_i32_14] : memref<16x384xf32, #tpu.memory_space<vmem>> -> memref<1x384xf32, #tpu.memory_space<vmem>>
      %16 = tpu.memref_squeeze %15 : memref<1x384xf32, #tpu.memory_space<vmem>> -> memref<384xf32, #tpu.memory_space<vmem>>
      %17 = tpu.memref_slice %arg6[%9] : memref<16x!tpu.dma_semaphore, #tpu.memory_space<semaphore_mem>> -> memref<1x!tpu.dma_semaphore, #tpu.memory_space<semaphore_mem>>
      %18 = tpu.memref_squeeze %17 : memref<1x!tpu.dma_semaphore, #tpu.memory_space<semaphore_mem>> -> memref<!tpu.dma_semaphore, #tpu.memory_space<semaphore_mem>>
      tpu.enqueue_dma source(%14 : memref<384xf32, #tpu.memory_space<any>>) target(%16 : memref<384xf32, #tpu.memory_space<vmem>>) target_semaphore(%18 : memref<!tpu.dma_semaphore, #tpu.memory_space<semaphore_mem>>)
    }
    %c16_i32_1 = arith.constant 16 : i32
    %c0_i32_2 = arith.constant 0 : i32
    %c16_i32_3 = arith.constant 16 : i32
    %2 = arith.addi %c0_i32_2, %c16_i32_3 : i32
    %c1_i32_4 = arith.constant 1 : i32
    scf.for %arg7 = %c0_i32_2 to %2 step %c1_i32_4  : i32 {
      %c1_i32_11 = arith.constant 1 : i32
      %8 = arith.muli %arg7, %c1_i32_11 : i32
      %c0_i32_12 = arith.constant 0 : i32
      %9 = arith.addi %c0_i32_12, %8 : i32
      %c0_i32_13 = arith.constant 0 : i32
      %c0_i32_14 = arith.constant 0 : i32
      %10 = tpu.memref_slice %arg3[%c0_i32_13, %c0_i32_14] : memref<16x384xf32, #tpu.memory_space<any>> -> memref<1x384xf32, #tpu.memory_space<any>>
      %11 = tpu.memref_squeeze %10 : memref<1x384xf32, #tpu.memory_space<any>> -> memref<384xf32, #tpu.memory_space<any>>
      %c0_i32_15 = arith.constant 0 : i32
      %12 = tpu.memref_slice %arg5[%9, %c0_i32_15] : memref<16x384xf32, #tpu.memory_space<vmem>> -> memref<1x384xf32, #tpu.memory_space<vmem>>
      %13 = tpu.memref_squeeze %12 : memref<1x384xf32, #tpu.memory_space<vmem>> -> memref<384xf32, #tpu.memory_space<vmem>>
      %14 = tpu.memref_slice %arg6[%9] : memref<16x!tpu.dma_semaphore, #tpu.memory_space<semaphore_mem>> -> memref<1x!tpu.dma_semaphore, #tpu.memory_space<semaphore_mem>>
      %15 = tpu.memref_squeeze %14 : memref<1x!tpu.dma_semaphore, #tpu.memory_space<semaphore_mem>> -> memref<!tpu.dma_semaphore, #tpu.memory_space<semaphore_mem>>
      tpu.wait_dma2 semaphore(%15 : memref<!tpu.dma_semaphore, #tpu.memory_space<semaphore_mem>>) src(%11 : memref<384xf32, #tpu.memory_space<any>>) dst(%13 : memref<384xf32, #tpu.memory_space<vmem>>)
    }
    %c16_i32_5 = arith.constant 16 : i32
    %c0 = arith.constant 0 : index
    %c0_6 = arith.constant 0 : index
    %3 = vector.load %arg5[%c0, %c0_6] : memref<16x384xf32, #tpu.memory_space<vmem>>, vector<16x384xf32>
    %c0_7 = arith.constant 0 : index
    %c0_8 = arith.constant 0 : index
    %4 = vector.load %arg2[%c0_7, %c0_8] : memref<16x1xf32, #tpu.memory_space<vmem>>, vector<16x1xf32>
    %5 = vector.broadcast %4 : vector<16x1xf32> to vector<16x384xf32>
    %6 = arith.mulf %3, %5 : vector<16x384xf32>
    %c0_9 = arith.constant 0 : index
    %c0_10 = arith.constant 0 : index
    %7 = vector.load %arg4[%c0_9, %c0_10] : memref<16x384xf32, #tpu.memory_space<vmem>>, vector<16x384xf32>
    tpu.vector_store %arg4[%c0_9, %c0_10], %6 {strides = array<i32>} : memref<16x384xf32, #tpu.memory_space<vmem>>, vector<16x384xf32>,
    return
  }
  func.func @transform_0(%arg0: i32, %arg1: memref<16xi32, #tpu.memory_space<smem>>) -> (i32, i32) {
    %c0_i32 = arith.constant 0 : i32
    %c0_i32_0 = arith.constant 0 : i32
    return %arg0, %c0_i32 : i32, i32
  }
  func.func @transform_2(%arg0: i32, %arg1: memref<16xi32, #tpu.memory_space<smem>>) -> (i32, i32) {
    %c0_i32 = arith.constant 0 : i32
    %c0_i32_0 = arith.constant 0 : i32
    return %arg0, %c0_i32 : i32, i32
  }
}

</mosaic_0001>

<llo_original>
// kernel: tpu_custom_call.1
$region0: #{tpu_custom_call.1}
  #allocation0 [shape = 'u32[]', space=smem, size = 0x4, offset = 0x4, fixed_abs, tag = 'smem constant byte address 0x4 - core index']
  #allocation1 [shape = 'u32[144,128]{1,0:T(1,128)}', space=vmem, size = 0x12000, scoped, tag = 'internal scratch']
  #allocation2 [shape = 'f32[16,384]{1,0:T(8,128)}', space=vmem, size = 0x6000, scoped, tag = 'scratch operand']
  #allocation3 [shape = 's32[16]{0}', space=sflag, size = 0x40, scoped, tag = 'scratch operand']
  #allocation4 [shape = 's32[1]{0}', space=sflag, size = 0x4, scoped, tag = 'scoped memory for tpu_custom_call.1']
  #allocation5 [shape = 'u8[512]{0}', space=smem, size = 0x200, scoped, tag = 'prefetched SMEM operand 0']
  #allocation8 [shape = 's32[]', space=sflag, size = 0x4, offset = 0, fixed_abs, tag = 'sflag constant byte address 0x0 - dummy sync flag']
  %s0 = inlined_call_operand.vmem [shape: s32[16], index: 0, kind: input, shape index: {}]
  %s1 = inlined_call_operand.vmem [shape: f32[16,1], index: 1, kind: input, shape index: {}]
  %s2 = inlined_call_operand.hbm [shape: f32[16,384], index: 2, kind: input, shape index: {}]
  %s3 = inlined_call_operand.hbm [shape: f32[16,384], index: 3, kind: output, shape index: {}]
  %s4 = sld [smem:[#allocation0]]
  $region28: #{tpu_custom_call.1} parent=0
    _
  %s6 = ssub.s32 1, %s4
  %s7 = scalar_select 0, %s6, %s4
  %s8 = sshll.u32 %s0, 4
  %s9 = int_to_ptr.vmem [resolvable:$true] %s8
  %11 = dma.vmem_to_smem %s9, 16, [#allocation5], [#allocation4]
  %12 = dma.done [#allocation4], 16
  %13 = sfence
  $region1: #{tpu_custom_call.1} parent=0
    #allocation6 [shape = 'u8[24576]{0}', space=vmem, size = 0x6000, scoped, tag = 'output window, operand 0, single buffered']
    #allocation7 [shape = 's32[1]{0}', space=sflag, size = 0x4, scoped, tag = 'scoped memory for tpu_custom_call.1']
    %14 = vsyncpa [#allocation7], 0
    // Predicated region
    $region2: #{tpu_custom_call.1} parent=1 // pred_check
      _
    $region3: #{tpu_custom_call.1} parent=1 // pred_check_branch
      %16 = sbr.rel (0) target = $region5
    $region4: #{tpu_custom_call.1} parent=1 // pred_region
      _
    $region5: #{tpu_custom_call.1} parent=1 // pred_fallthru
      _
    %s17 = smul.u32 0, 16
    loop: start=0, step=1, limit=16
    $region6: #{tpu_custom_call.1} parent=1 // loop_pre_header
      _
    $region7: #{tpu_custom_call.1} parent=1 // loop_header
      %s19 = sphi 0, %s23
      %p20 = scmp.ge.s32.totalorder %s19, 16
    $region8: #{tpu_custom_call.1} parent=1 // loop_header_branch
      %22 = sbr.rel (%p20) target = $region12
    $region9: #{tpu_custom_call.1} parent=1 // loop_body
      %s24 = sadd.s32 %s17, %s19
      %s25 = sld [smem:[#allocation5 + %s24]]
      %s26 = sshrl.u32 %s25, 3
      %s27 = sand.u32 %s25, 7
      %s28 = smul.u32 %s26, 24
      %s29 = sadd.s32 %s27, %s28
      %s30 = smul.addr %s29, 16
      %s31 = scalar_lea.hbm %s2, %s30
      %s32 = sshrl.u32 %s19, 3
      %s33 = sand.u32 %s19, 7
      %s34 = smul.u32 %s32, 24
      %s35 = sadd.s32 %s33, %s34
      %s36 = scalar_lea.vmem [#allocation2], %s35
      %s37 = scalar_lea.sflag [#allocation3], %s19
      %s39 = sshll.u32 %s36, 4
      %s40 = int_to_ptr.vmem [resolvable:$true] %s39
      %42 = dma.hbm_to_vmem [thread:$0]  %s31, 48, %s40, %s37, 128, 128, 1
    $region10: #{tpu_custom_call.1} parent=1 // loop_footer
      %s23 = sadd.s32 1, %s19
    $region11: #{tpu_custom_call.1} parent=1 // loop_footer_branch
      %18 = sbr.rel target = $region7
    $region12: #{tpu_custom_call.1} parent=1 // loop_exit
      _
    loop: start=0, step=1, limit=16
    $region13: #{tpu_custom_call.1} parent=1 // loop_pre_header
      _
    $region14: #{tpu_custom_call.1} parent=1 // loop_header
      %s44 = sphi 0, %s48
      %p45 = scmp.ge.s32.totalorder %s44, 16
    $region15: #{tpu_custom_call.1} parent=1 // loop_header_branch
      %47 = sbr.rel (%p45) target = $region19
    $region16: #{tpu_custom_call.1} parent=1 // loop_body
      %s49 = scalar_lea.sflag [#allocation3], %s44
      %51 = dma.done %s49, 48
    $region17: #{tpu_custom_call.1} parent=1 // loop_footer
      %s48 = sadd.s32 1, %s44
    $region18: #{tpu_custom_call.1} parent=1 // loop_footer_branch
      %43 = sbr.rel target = $region14
    $region19: #{tpu_custom_call.1} parent=1 // loop_exit
      _
    %v52 = vld [vmem:[#allocation2] sm:$0xff]
    %v53 = vld [vmem:[#allocation2 + $0x8] sm:$0xff]
    %v54 = vld [vmem:[#allocation2 + $0x10] sm:$0xff]
    %v55 = vld [vmem:[#allocation2 + $0x18] sm:$0xff]
    %v56 = vld [vmem:[#allocation2 + $0x20] sm:$0xff]
    %v57 = vld [vmem:[#allocation2 + $0x28] sm:$0xff]
    %v58 = vld [vmem:[%s1] sm:$0xff]
    %v59 = vld [vmem:[%s1 + $0x8] sm:$0xff]
    %61 = vset.pattern.permute.xlu0 0
    %62 = vperm.xlu0 %61, %v58
    %v63 = vpop.permute.xlu0 %62
    %66 = vset.pattern.permute.xlu0 0
    %67 = vperm.xlu0 %66, %v59
    %v68 = vpop.permute.xlu0 %67
    %v70 = vmul.f32 %v52, %v63
    %v71 = vmul.f32 %v53, %v63
    %v72 = vmul.f32 %v54, %v63
    %v73 = vmul.f32 %v55, %v68
    %v74 = vmul.f32 %v56, %v68
    %v75 = vmul.f32 %v57, %v68
    %76 = vst [vmem:[#allocation6] sm:$0xff] %v70
    %77 = vst [vmem:[#allocation6 + $0x8] sm:$0xff] %v71
    %78 = vst [vmem:[#allocation6 + $0x10] sm:$0xff] %v72
    %79 = vst [vmem:[#allocation6 + $0x18] sm:$0xff] %v73
    %80 = vst [vmem:[#allocation6 + $0x20] sm:$0xff] %v74
    %81 = vst [vmem:[#allocation6 + $0x28] sm:$0xff] %v75
    // Predicated region
    $region20: #{tpu_custom_call.1} parent=1 // pred_check
      _
    $region21: #{tpu_custom_call.1} parent=1 // pred_check_branch
      %83 = sbr.rel (0) target = $region23
    $region22: #{tpu_custom_call.1} parent=1 // pred_region
      %s85 = ssub.s32 768, 768
      %86 = vsyncadd [#allocation7], %s85
      %s87 = sshll.u32 [#allocation6], 4
      %s88 = int_to_ptr.vmem [resolvable:$true] %s87
      %93 = dma.vmem_to_hbm [thread:$0]  %s88, 768, %s3, [#allocation7], 384, 384, 24
    $region23: #{tpu_custom_call.1} parent=1 // pred_fallthru
      _
    // Predicated region
    $region24: #{tpu_custom_call.1} parent=1 // pred_check
      _
    $region25: #{tpu_custom_call.1} parent=1 // pred_check_branch
      %95 = sbr.rel (0) target = $region27
    $region26: #{tpu_custom_call.1} parent=1 // pred_region
      %96 = dma.done [#allocation7], 768
    $region27: #{tpu_custom_call.1} parent=1 // pred_fallthru
      _
    %97 = vsyncpa [#allocation7], 1
  %98 = vsyncmov [#allocation3]
  %s99 = vpop.sfrf %98
  %p100 = scmp.eq.s32.totalorder %s99, 0
  %p101 = pneg %p100
  %103 = shalt.err (%p101)
  %s104 = scalar_lea.sflag [#allocation3], 1
  %105 = vsyncmov %s104
  %s106 = vpop.sfrf %105
  %p107 = scmp.eq.s32.totalorder %s106, 0
  %p108 = pneg %p107
  %110 = shalt.err (%p108)
  %s111 = scalar_lea.sflag [#allocation3], 2
  %112 = vsyncmov %s111
  %s113 = vpop.sfrf %112
  %p114 = scmp.eq.s32.totalorder %s113, 0
  %p115 = pneg %p114
  %117 = shalt.err (%p115)
  %s118 = scalar_lea.sflag [#allocation3], 3
  %119 = vsyncmov %s118
  %s120 = vpop.sfrf %119
  %p121 = scmp.eq.s32.totalorder %s120, 0
  %p122 = pneg %p121
  %124 = shalt.err (%p122)
  %s125 = scalar_lea.sflag [#allocation3], 4
  %126 = vsyncmov %s125
  %s127 = vpop.sfrf %126
  %p128 = scmp.eq.s32.totalorder %s127, 0
  %p129 = pneg %p128
  %131 = shalt.err (%p129)
  %s132 = scalar_lea.sflag [#allocation3], 5
  %133 = vsyncmov %s132
  %s134 = vpop.sfrf %133
  %p135 = scmp.eq.s32.totalorder %s134, 0
  %p136 = pneg %p135
  %138 = shalt.err (%p136)
  %s139 = scalar_lea.sflag [#allocation3], 6
  %140 = vsyncmov %s139
  %s141 = vpop.sfrf %140
  %p142 = scmp.eq.s32.totalorder %s141, 0
  %p143 = pneg %p142
  %145 = shalt.err (%p143)
  %s146 = scalar_lea.sflag [#allocation3], 7
  %147 = vsyncmov %s146
  %s148 = vpop.sfrf %147
  %p149 = scmp.eq.s32.totalorder %s148, 0
  %p150 = pneg %p149
  %152 = shalt.err (%p150)
  %s153 = scalar_lea.sflag [#allocation3], 8
  %154 = vsyncmov %s153
  %s155 = vpop.sfrf %154
  %p156 = scmp.eq.s32.totalorder %s155, 0
  %p157 = pneg %p156
  %159 = shalt.err (%p157)
  %s160 = scalar_lea.sflag [#allocation3], 9
  %161 = vsyncmov %s160
  %s162 = vpop.sfrf %161
  %p163 = scmp.eq.s32.totalorder %s162, 0
  %p164 = pneg %p163
  %166 = shalt.err (%p164)
  %s167 = scalar_lea.sflag [#allocation3], 10
  %168 = vsyncmov %s167
  %s169 = vpop.sfrf %168
  %p170 = scmp.eq.s32.totalorder %s169, 0
  %p171 = pneg %p170
  %173 = shalt.err (%p171)
  %s174 = scalar_lea.sflag [#allocation3], 11
  %175 = vsyncmov %s174
  %s176 = vpop.sfrf %175
  %p177 = scmp.eq.s32.totalorder %s176, 0
  %p178 = pneg %p177
  %180 = shalt.err (%p178)
  %s181 = scalar_lea.sflag [#allocation3], 12
  %182 = vsyncmov %s181
  %s183 = vpop.sfrf %182
  %p184 = scmp.eq.s32.totalorder %s183, 0
  %p185 = pneg %p184
  %187 = shalt.err (%p185)
  %s188 = scalar_lea.sflag [#allocation3], 13
  %189 = vsyncmov %s188
  %s190 = vpop.sfrf %189
  %p191 = scmp.eq.s32.totalorder %s190, 0
  %p192 = pneg %p191
  %194 = shalt.err (%p192)
  %s195 = scalar_lea.sflag [#allocation3], 14
  %196 = vsyncmov %s195
  %s197 = vpop.sfrf %196
  %p198 = scmp.eq.s32.totalorder %s197, 0
  %p199 = pneg %p198
  %201 = shalt.err (%p199)
  %s202 = scalar_lea.sflag [#allocation3], 15
  %203 = vsyncmov %s202
  %s204 = vpop.sfrf %203
  %p205 = scmp.eq.s32.totalorder %s204, 0
  %p206 = pneg %p205
  %208 = shalt.err (%p206)

</llo_original>
